<compile_context>
chip_gen: v7x
topology: tpu7x:2x2x1
jax: 0.10.0
libtpu: 0.0.40
codegen_flags: <defaults>
</compile_context>

<pallas_src>
import jax
import jax.numpy as jnp
from jax.experimental import pallas as pl
from jax.experimental.pallas import tpu as pltpu


def _activation_unit_kernel(behaviors_ref, ad_ref, w1_ref, b1_ref, w2_ref,
                            b2_ref, alpha_ref, out_ref):
    # behaviors_ref: (tT, B, D)  T-major tile of the behavior sequence
    # ad_ref:        (B, D)      ad embedding (last sequence position)
    # w1_ref:        (3D, H)     Linear(3D->H) weight, rows = [beh | prod | ad]
    # b1_ref:        (1, H)
    # w2_ref:        (1, H)      Linear(H->1) weight as a row
    # b2_ref, alpha_ref: (1,) SMEM scalars
    # out_ref:       (tT, B)
    tT, B, D = behaviors_ref.shape
    H = b1_ref.shape[-1]

    ad = ad_ref[...]                                        # (B, D)

    # t-invariant base (b1 + ad @ W1_ad) and combined per-(b, d) weight rows:
    #   wrow_d[b, :] = W1_beh[d, :] + ad[b, d] * W1_prod[d, :]
    base = b1_ref[...]                                      # (1, H) -> (B, H)
    wrows = []
    for d in range(D):                                      # D static: unrolled
        ad_col = ad[:, d:d + 1]                             # (B, 1)
        base = base + ad_col * w1_ref[2 * D + d:2 * D + d + 1, :]
        wrows.append(w1_ref[d:d + 1, :] + ad_col * w1_ref[D + d:D + d + 1, :])

    behaviors = behaviors_ref[...]                          # (tT, B, D)
    # h[t, b, :] = base[b, :] + sum_d behaviors[t, b, d] * wrow_d[b, :]
    h = jnp.broadcast_to(base, (tT, B, H))
    for d in range(D):
        h = h + behaviors[:, :, d:d + 1] * wrows[d]         # (tT,B,1)*(B,H)

    # Dice: per-(t, h) statistics over the batch axis, unbiased std
    # (torch.std default divisor B-1), no eps -- matches the reference.
    mean = jnp.mean(h, axis=1, keepdims=True)               # (tT, 1, H)
    centered = h - mean
    var = jnp.sum(centered * centered, axis=1, keepdims=True) * (1.0 / (B - 1))
    inv_std = jax.lax.rsqrt(var)                            # EUP rsqrt
    norm = centered * inv_std
    gate = 1.0 / (1.0 + jnp.exp(-norm))                     # sigmoid via exp
    alpha = alpha_ref[0]
    # h*gate + alpha*h*(1-gate) == h * (alpha + (1-alpha)*gate)
    dice = h * (alpha + (1.0 - alpha) * gate)

    # Linear(H -> 1): VPU multiply + lane reduction; lane-dense (tT, B) store.
    out = jnp.sum(dice * w2_ref[...], axis=-1) + b2_ref[0]  # (tT, B)
    out_ref[...] = out.astype(out_ref.dtype)


def _pick_t_tile(B, T, D, H):
    # Rough per-T-position f32 working set: double-buffered behaviors block
    # (2*B*D), a handful of live (B, H) intermediates (h/centered/gate/dice),
    # and the output row.  Conservative so the same tile fits v5e/v6e scoped
    # defaults and v7x's 64 MiB physical VMEM.
    bytes_per_t = 4 * B * (2 * D + 5 * H + 2)
    budget = 8 * 1024 * 1024
    max_t = max(1, budget // max(1, bytes_per_t))
    if T <= max_t:
        return T                                 # single tile == full T
    return max(8, (max_t // 8) * 8)              # sublane-aligned T tiles


def activation_unit(x, w1, b1, w2, b2, alpha):
    """DIN ActivationUnit forward.  x: (B, S, D) float32 -> (B, S-1, 1)."""
    B, S, D = x.shape
    T = S - 1
    H = w1.shape[1]
    assert w1.shape[0] == 3 * D

    # T-major layout: every T position is independent (stats are over batch),
    # and it keeps (B, D)/(B, H) as the tiled minor dims of every kernel value.
    behaviors = jnp.transpose(x[:, :T, :], (1, 0, 2))        # (T, B, D)
    ad = x[:, T, :]                                          # (B, D)

    tT = _pick_t_tile(B, T, D, H)
    num_tiles = pl.cdiv(T, tT)
    T_pad = num_tiles * tT
    if T_pad != T:
        # 'edge' padding keeps the padded rows' batch variance nonzero (no NaN
        # busywork); padded positions are sliced away below.
        behaviors = jnp.pad(behaviors, ((0, T_pad - T), (0, 0), (0, 0)),
                            mode='edge')

    # Parameter glue (wrapper-side layout plumbing only).
    w1_f = w1.astype(jnp.float32)
    b1_2 = b1.reshape(1, H).astype(jnp.float32)
    w2_2 = w2.reshape(1, H).astype(jnp.float32)   # (H,1) -> row for lane reduce
    b2_s = b2.reshape(1).astype(jnp.float32)
    alpha_s = alpha.reshape(1).astype(jnp.float32)

    smem = pl.BlockSpec(memory_space=pltpu.MemorySpace.SMEM)
    out_tb = pl.pallas_call(
        _activation_unit_kernel,
        out_shape=jax.ShapeDtypeStruct((T_pad, B), jnp.float32),
        grid=(num_tiles,),
        in_specs=[
            pl.BlockSpec((tT, B, D), lambda t: (t, 0, 0)),   # behaviors tile
            pl.BlockSpec((B, D), lambda t: (0, 0)),          # ad embedding
            pl.BlockSpec((3 * D, H), lambda t: (0, 0)),      # W1
            pl.BlockSpec((1, H), lambda t: (0, 0)),          # b1
            pl.BlockSpec((1, H), lambda t: (0, 0)),          # w2 row
            smem,                                            # b2 scalar
            smem,                                            # alpha scalar
        ],
        out_specs=pl.BlockSpec((tT, B), lambda t: (t, 0)),   # lane-dense in B
        compiler_params=pltpu.CompilerParams(
            dimension_semantics=("parallel",),
            vmem_limit_bytes=32 * 1024 * 1024),
    )(behaviors, ad, w1_f, b1_2, w2_2, b2_s, alpha_s)

    # (T_pad, B) -> the module's (B, T, 1) output layout.
    return jnp.transpose(out_tb[:T, :], (1, 0))[:, :, None]


def activation_unit_ref(x, w1, b1, w2, b2, alpha):
    """Pure-JAX reference mirroring the PyTorch forward (sanity check)."""
    B, S, D = x.shape
    T = S - 1
    behaviors = x[:, :T, :]
    ads = jnp.broadcast_to(x[:, T:, :], (B, T, D))
    p = behaviors * ads
    feat = jnp.concatenate([behaviors, p, ads], axis=2)
    h = jnp.dot(feat, w1, precision=jax.lax.Precision.HIGHEST) + b1
    mean = h.mean(axis=0)
    std = jnp.sqrt(jnp.sum((h - mean) ** 2, axis=0) / (B - 1))
    gate = jax.nn.sigmoid((h - mean) / std)
    d = h * gate + alpha * h * (1 - gate)
    return jnp.dot(d, w2, precision=jax.lax.Precision.HIGHEST) + b2


if __name__ == "__main__":
    B, S, D, H = 2, 8, 4, 36   # embed_dim=4 -> Linear(12, 36), Linear(36, 1)

    key = jax.random.PRNGKey(0)
    kx, kw1, kb1, kw2, kb2 = jax.random.split(key, 5)

    x = jax.random.normal(kx, (B, S, D), dtype=jnp.float32)
    # Deterministic synthetic parameters (shapes from the module __init__).
    w1 = jax.random.normal(kw1, (3 * D, H), dtype=jnp.float32) * 0.1
    b1 = jax.random.normal(kb1, (H,), dtype=jnp.float32) * 0.1
    w2 = jax.random.normal(kw2, (H, 1), dtype=jnp.float32) * 0.1
    b2 = jax.random.normal(kb2, (1,), dtype=jnp.float32) * 0.1
    alpha = jnp.zeros((1,), dtype=jnp.float32)   # Dice.alpha init (zeros)

    out = activation_unit(x, w1, b1, w2, b2, alpha)
    out = jax.block_until_ready(out)

    ref = activation_unit_ref(x, w1, b1, w2, b2, alpha)
    assert out.shape == (B, S - 1, 1)
    max_err = float(jnp.max(jnp.abs(out - ref)))
    assert jnp.allclose(out, ref, atol=1e-4, rtol=1e-4), max_err

    print("KERNEL_OK")
</pallas_src>

<mosaic_0001>
module attributes {stable_mosaic.version = 11 : i64} {
  func.func @_activation_unit_kernel(%arg0: i32, %arg1: memref<7x2x4xf32, #tpu.memory_space<vmem>>, %arg2: memref<2x4xf32, #tpu.memory_space<vmem>>, %arg3: memref<12x36xf32, #tpu.memory_space<vmem>>, %arg4: memref<1x36xf32, #tpu.memory_space<vmem>>, %arg5: memref<1x36xf32, #tpu.memory_space<vmem>>, %arg6: memref<1xf32, #tpu.memory_space<smem>>, %arg7: memref<1xf32, #tpu.memory_space<smem>>, %arg8: memref<7x2xf32, #tpu.memory_space<vmem>>) attributes {dimension_semantics = [#tpu.dimension_semantics<parallel>], iteration_bounds = array<i64: 1>, scalar_prefetch = 0 : i64, scratch_operands = 0 : i64, tpu.core_type = #tpu.core_type<tc>, window_params = [{transform_indices = @transform_0, window_bounds = array<i64: 7, 2, 4>}, {pipeline_mode = #tpu.pipeline_mode<synchronous>, transform_indices = @transform_1, window_bounds = array<i64: 2, 4>}, {pipeline_mode = #tpu.pipeline_mode<synchronous>, transform_indices = @transform_2, window_bounds = array<i64: 12, 36>}, {pipeline_mode = #tpu.pipeline_mode<synchronous>, transform_indices = @transform_3, window_bounds = array<i64: 1, 36>}, {pipeline_mode = #tpu.pipeline_mode<synchronous>, transform_indices = @transform_4, window_bounds = array<i64: 1, 36>}, {transform_indices = @transform_5, window_bounds = array<i64: 1>}, {transform_indices = @transform_6, window_bounds = array<i64: 1>}, {transform_indices = @transform_7, window_bounds = array<i64: 7, 2>}]} {
    %c0 = arith.constant 0 : index
    %c0_0 = arith.constant 0 : index
    %0 = vector.load %arg2[%c0, %c0_0] : memref<2x4xf32, #tpu.memory_space<vmem>>, vector<2x4xf32>
    %c0_1 = arith.constant 0 : index
    %c0_2 = arith.constant 0 : index
    %1 = vector.load %arg4[%c0_1, %c0_2] : memref<1x36xf32, #tpu.memory_space<vmem>>, vector<1x36xf32>
    %2 = vector.extract_strided_slice %0 {offsets = [0, 0], sizes = [2, 1], strides = [1, 1]} : vector<2x4xf32> to vector<2x1xf32>
    %c8 = arith.constant 8 : index
    %c0_3 = arith.constant 0 : index
    %3 = vector.load %arg3[%c8, %c0_3] : memref<12x36xf32, #tpu.memory_space<vmem>>, vector<1x36xf32>
    %4 = vector.broadcast %2 : vector<2x1xf32> to vector<2x36xf32>
    %5 = vector.broadcast %3 : vector<1x36xf32> to vector<2x36xf32>
    %6 = arith.mulf %4, %5 : vector<2x36xf32>
    %7 = vector.broadcast %1 : vector<1x36xf32> to vector<2x36xf32>
    %8 = arith.addf %7, %6 : vector<2x36xf32>
    %c0_4 = arith.constant 0 : index
    %c0_5 = arith.constant 0 : index
    %9 = vector.load %arg3[%c0_4, %c0_5] : memref<12x36xf32, #tpu.memory_space<vmem>>, vector<1x36xf32>
    %c4 = arith.constant 4 : index
    %c0_6 = arith.constant 0 : index
    %10 = vector.load %arg3[%c4, %c0_6] : memref<12x36xf32, #tpu.memory_space<vmem>>, vector<1x36xf32>
    %11 = vector.broadcast %2 : vector<2x1xf32> to vector<2x36xf32>
    %12 = vector.broadcast %10 : vector<1x36xf32> to vector<2x36xf32>
    %13 = arith.mulf %11, %12 : vector<2x36xf32>
    %14 = vector.broadcast %9 : vector<1x36xf32> to vector<2x36xf32>
    %15 = arith.addf %14, %13 : vector<2x36xf32>
    %16 = vector.extract_strided_slice %0 {offsets = [0, 1], sizes = [2, 1], strides = [1, 1]} : vector<2x4xf32> to vector<2x1xf32>
    %c9 = arith.constant 9 : index
    %c0_7 = arith.constant 0 : index
    %17 = vector.load %arg3[%c9, %c0_7] : memref<12x36xf32, #tpu.memory_space<vmem>>, vector<1x36xf32>
    %18 = vector.broadcast %16 : vector<2x1xf32> to vector<2x36xf32>
    %19 = vector.broadcast %17 : vector<1x36xf32> to vector<2x36xf32>
    %20 = arith.mulf %18, %19 : vector<2x36xf32>
    %21 = arith.addf %8, %20 : vector<2x36xf32>
    %c1 = arith.constant 1 : index
    %c0_8 = arith.constant 0 : index
    %22 = vector.load %arg3[%c1, %c0_8] : memref<12x36xf32, #tpu.memory_space<vmem>>, vector<1x36xf32>
    %c5 = arith.constant 5 : index
    %c0_9 = arith.constant 0 : index
    %23 = vector.load %arg3[%c5, %c0_9] : memref<12x36xf32, #tpu.memory_space<vmem>>, vector<1x36xf32>
    %24 = vector.broadcast %16 : vector<2x1xf32> to vector<2x36xf32>
    %25 = vector.broadcast %23 : vector<1x36xf32> to vector<2x36xf32>
    %26 = arith.mulf %24, %25 : vector<2x36xf32>
    %27 = vector.broadcast %22 : vector<1x36xf32> to vector<2x36xf32>
    %28 = arith.addf %27, %26 : vector<2x36xf32>
    %29 = vector.extract_strided_slice %0 {offsets = [0, 2], sizes = [2, 1], strides = [1, 1]} : vector<2x4xf32> to vector<2x1xf32>
    %c10 = arith.constant 10 : index
    %c0_10 = arith.constant 0 : index
    %30 = vector.load %arg3[%c10, %c0_10] : memref<12x36xf32, #tpu.memory_space<vmem>>, vector<1x36xf32>
    %31 = vector.broadcast %29 : vector<2x1xf32> to vector<2x36xf32>
    %32 = vector.broadcast %30 : vector<1x36xf32> to vector<2x36xf32>
    %33 = arith.mulf %31, %32 : vector<2x36xf32>
    %34 = arith.addf %21, %33 : vector<2x36xf32>
    %c2 = arith.constant 2 : index
    %c0_11 = arith.constant 0 : index
    %35 = vector.load %arg3[%c2, %c0_11] : memref<12x36xf32, #tpu.memory_space<vmem>>, vector<1x36xf32>
    %c6 = arith.constant 6 : index
    %c0_12 = arith.constant 0 : index
    %36 = vector.load %arg3[%c6, %c0_12] : memref<12x36xf32, #tpu.memory_space<vmem>>, vector<1x36xf32>
    %37 = vector.broadcast %29 : vector<2x1xf32> to vector<2x36xf32>
    %38 = vector.broadcast %36 : vector<1x36xf32> to vector<2x36xf32>
    %39 = arith.mulf %37, %38 : vector<2x36xf32>
    %40 = vector.broadcast %35 : vector<1x36xf32> to vector<2x36xf32>
    %41 = arith.addf %40, %39 : vector<2x36xf32>
    %42 = vector.extract_strided_slice %0 {offsets = [0, 3], sizes = [2, 1], strides = [1, 1]} : vector<2x4xf32> to vector<2x1xf32>
    %c11 = arith.constant 11 : index
    %c0_13 = arith.constant 0 : index
    %43 = vector.load %arg3[%c11, %c0_13] : memref<12x36xf32, #tpu.memory_space<vmem>>, vector<1x36xf32>
    %44 = vector.broadcast %42 : vector<2x1xf32> to vector<2x36xf32>
    %45 = vector.broadcast %43 : vector<1x36xf32> to vector<2x36xf32>
    %46 = arith.mulf %44, %45 : vector<2x36xf32>
    %47 = arith.addf %34, %46 : vector<2x36xf32>
    %c3 = arith.constant 3 : index
    %c0_14 = arith.constant 0 : index
    %48 = vector.load %arg3[%c3, %c0_14] : memref<12x36xf32, #tpu.memory_space<vmem>>, vector<1x36xf32>
    %c7 = arith.constant 7 : index
    %c0_15 = arith.constant 0 : index
    %49 = vector.load %arg3[%c7, %c0_15] : memref<12x36xf32, #tpu.memory_space<vmem>>, vector<1x36xf32>
    %50 = vector.broadcast %42 : vector<2x1xf32> to vector<2x36xf32>
    %51 = vector.broadcast %49 : vector<1x36xf32> to vector<2x36xf32>
    %52 = arith.mulf %50, %51 : vector<2x36xf32>
    %53 = vector.broadcast %48 : vector<1x36xf32> to vector<2x36xf32>
    %54 = arith.addf %53, %52 : vector<2x36xf32>
    %c0_16 = arith.constant 0 : index
    %c0_17 = arith.constant 0 : index
    %c0_18 = arith.constant 0 : index
    %55 = vector.load %arg1[%c0_16, %c0_17, %c0_18] : memref<7x2x4xf32, #tpu.memory_space<vmem>>, vector<7x2x4xf32>
    %56 = vector.shape_cast %47 : vector<2x36xf32> to vector<1x2x36xf32>
    %57 = vector.broadcast %56 : vector<1x2x36xf32> to vector<7x2x36xf32>
    %58 = vector.extract_strided_slice %55 {offsets = [0, 0, 0], sizes = [7, 2, 1], strides = [1, 1, 1]} : vector<7x2x4xf32> to vector<7x2x1xf32>
    %59 = vector.shape_cast %15 : vector<2x36xf32> to vector<1x2x36xf32>
    %60 = vector.broadcast %58 : vector<7x2x1xf32> to vector<7x2x36xf32>
    %61 = vector.broadcast %59 : vector<1x2x36xf32> to vector<7x2x36xf32>
    %62 = arith.mulf %60, %61 : vector<7x2x36xf32>
    %63 = arith.addf %57, %62 : vector<7x2x36xf32>
    %64 = vector.extract_strided_slice %55 {offsets = [0, 0, 1], sizes = [7, 2, 1], strides = [1, 1, 1]} : vector<7x2x4xf32> to vector<7x2x1xf32>
    %65 = vector.shape_cast %28 : vector<2x36xf32> to vector<1x2x36xf32>
    %66 = vector.broadcast %64 : vector<7x2x1xf32> to vector<7x2x36xf32>
    %67 = vector.broadcast %65 : vector<1x2x36xf32> to vector<7x2x36xf32>
    %68 = arith.mulf %66, %67 : vector<7x2x36xf32>
    %69 = arith.addf %63, %68 : vector<7x2x36xf32>
    %70 = vector.extract_strided_slice %55 {offsets = [0, 0, 2], sizes = [7, 2, 1], strides = [1, 1, 1]} : vector<7x2x4xf32> to vector<7x2x1xf32>
    %71 = vector.shape_cast %41 : vector<2x36xf32> to vector<1x2x36xf32>
    %72 = vector.broadcast %70 : vector<7x2x1xf32> to vector<7x2x36xf32>
    %73 = vector.broadcast %71 : vector<1x2x36xf32> to vector<7x2x36xf32>
    %74 = arith.mulf %72, %73 : vector<7x2x36xf32>
    %75 = arith.addf %69, %74 : vector<7x2x36xf32>
    %76 = vector.extract_strided_slice %55 {offsets = [0, 0, 3], sizes = [7, 2, 1], strides = [1, 1, 1]} : vector<7x2x4xf32> to vector<7x2x1xf32>
    %77 = vector.shape_cast %54 : vector<2x36xf32> to vector<1x2x36xf32>
    %78 = vector.broadcast %76 : vector<7x2x1xf32> to vector<7x2x36xf32>
    %79 = vector.broadcast %77 : vector<1x2x36xf32> to vector<7x2x36xf32>
    %80 = arith.mulf %78, %79 : vector<7x2x36xf32>
    %81 = arith.addf %75, %80 : vector<7x2x36xf32>
    %cst = arith.constant dense<0.000000e+00> : vector<7x36xf32>
    %82 = vector.multi_reduction <add>, %81, %cst [1] : vector<7x2x36xf32> to vector<7x36xf32>
    %83 = vector.shape_cast %82 : vector<7x36xf32> to vector<7x1x36xf32>
    %cst_19 = arith.constant 2.000000e+00 : f32
    %84 = vector.broadcast %cst_19 : f32 to vector<7x1x36xf32>
    %85 = arith.divf %83, %84 : vector<7x1x36xf32>
    %86 = vector.broadcast %85 : vector<7x1x36xf32> to vector<7x2x36xf32>
    %87 = arith.subf %81, %86 : vector<7x2x36xf32>
    %88 = arith.mulf %87, %87 : vector<7x2x36xf32>
    %cst_20 = arith.constant dense<0.000000e+00> : vector<7x36xf32>
    %89 = vector.multi_reduction <add>, %88, %cst_20 [1] : vector<7x2x36xf32> to vector<7x36xf32>
    %90 = vector.shape_cast %89 : vector<7x36xf32> to vector<7x1x36xf32>
    %cst_21 = arith.constant 1.000000e+00 : f32
    %91 = vector.broadcast %cst_21 : f32 to vector<7x1x36xf32>
    %92 = arith.mulf %90, %91 : vector<7x1x36xf32>
    %93 = math.rsqrt %92 : vector<7x1x36xf32>
    %94 = vector.broadcast %93 : vector<7x1x36xf32> to vector<7x2x36xf32>
    %95 = arith.mulf %87, %94 : vector<7x2x36xf32>
    %cst_22 = arith.constant 0.000000e+00 : f32
    %96 = vector.broadcast %cst_22 : f32 to vector<7x2x36xf32>
    %97 = arith.subf %96, %95 : vector<7x2x36xf32>
    %98 = math.exp %97 : vector<7x2x36xf32>
    %cst_23 = arith.constant 1.000000e+00 : f32
    %99 = vector.broadcast %cst_23 : f32 to vector<7x2x36xf32>
    %100 = arith.addf %99, %98 : vector<7x2x36xf32>
    %cst_24 = arith.constant 1.000000e+00 : f32
    %101 = vector.broadcast %cst_24 : f32 to vector<7x2x36xf32>
    %102 = arith.divf %101, %100 : vector<7x2x36xf32>
    %c0_25 = arith.constant 0 : index
    %103 = memref.load %arg7[%c0_25] : memref<1xf32, #tpu.memory_space<smem>>
    %cst_26 = arith.constant 1.000000e+00 : f32
    %104 = arith.subf %cst_26, %103 : f32
    %105 = vector.broadcast %104 : f32 to vector<7x2x36xf32>
    %106 = arith.mulf %105, %102 : vector<7x2x36xf32>
    %107 = vector.broadcast %103 : f32 to vector<7x2x36xf32>
    %108 = arith.addf %107, %106 : vector<7x2x36xf32>
    %109 = arith.mulf %81, %108 : vector<7x2x36xf32>
    %c0_27 = arith.constant 0 : index
    %c0_28 = arith.constant 0 : index
    %110 = vector.load %arg5[%c0_27, %c0_28] : memref<1x36xf32, #tpu.memory_space<vmem>>, vector<1x36xf32>
    %111 = vector.shape_cast %110 : vector<1x36xf32> to vector<1x1x36xf32>
    %112 = vector.broadcast %111 : vector<1x1x36xf32> to vector<7x2x36xf32>
    %113 = arith.mulf %109, %112 : vector<7x2x36xf32>
    %cst_29 = arith.constant dense<0.000000e+00> : vector<7x2xf32>
    %114 = vector.multi_reduction <add>, %113, %cst_29 [2] : vector<7x2x36xf32> to vector<7x2xf32>
    %c0_30 = arith.constant 0 : index
    %115 = memref.load %arg6[%c0_30] : memref<1xf32, #tpu.memory_space<smem>>
    %116 = vector.broadcast %115 : f32 to vector<7x2xf32>
    %117 = arith.addf %114, %116 : vector<7x2xf32>
    %c0_31 = arith.constant 0 : index
    %c0_32 = arith.constant 0 : index
    %118 = vector.load %arg8[%c0_31, %c0_32] : memref<7x2xf32, #tpu.memory_space<vmem>>, vector<7x2xf32>
    tpu.vector_store %arg8[%c0_31, %c0_32], %117 {strides = array<i32>} : memref<7x2xf32, #tpu.memory_space<vmem>>, vector<7x2xf32>,
    return
  }
  func.func @transform_0(%arg0: i32) -> (i32, i32, i32) {
    %c0_i32 = arith.constant 0 : i32
    %c0_i32_0 = arith.constant 0 : i32
    %c0_i32_1 = arith.constant 0 : i32
    return %arg0, %c0_i32, %c0_i32_0 : i32, i32, i32
  }
  func.func @transform_1(%arg0: i32) -> (i32, i32) {
    %c0_i32 = arith.constant 0 : i32
    %c0_i32_0 = arith.constant 0 : i32
    %c0_i32_1 = arith.constant 0 : i32
    return %c0_i32, %c0_i32_0 : i32, i32
  }
  func.func @transform_2(%arg0: i32) -> (i32, i32) {
    %c0_i32 = arith.constant 0 : i32
    %c0_i32_0 = arith.constant 0 : i32
    %c0_i32_1 = arith.constant 0 : i32
    return %c0_i32, %c0_i32_0 : i32, i32
  }
  func.func @transform_3(%arg0: i32) -> (i32, i32) {
    %c0_i32 = arith.constant 0 : i32
    %c0_i32_0 = arith.constant 0 : i32
    %c0_i32_1 = arith.constant 0 : i32
    return %c0_i32, %c0_i32_0 : i32, i32
  }
  func.func @transform_4(%arg0: i32) -> (i32, i32) {
    %c0_i32 = arith.constant 0 : i32
    %c0_i32_0 = arith.constant 0 : i32
    %c0_i32_1 = arith.constant 0 : i32
    return %c0_i32, %c0_i32_0 : i32, i32
  }
  func.func @transform_5(%arg0: i32) -> i32 {
    %c0_i32 = arith.constant 0 : i32
    %c0_i32_0 = arith.constant 0 : i32
    return %c0_i32 : i32
  }
  func.func @transform_6(%arg0: i32) -> i32 {
    %c0_i32 = arith.constant 0 : i32
    %c0_i32_0 = arith.constant 0 : i32
    return %c0_i32 : i32
  }
  func.func @transform_7(%arg0: i32) -> (i32, i32) {
    %c0_i32 = arith.constant 0 : i32
    %c0_i32_0 = arith.constant 0 : i32
    return %arg0, %c0_i32 : i32, i32
  }
}

</mosaic_0001>

<llo_original>
// kernel: tpu_custom_call.1
$region0: #{tpu_custom_call.1}
  #allocation0 [shape = 'u32[]', space=smem, size = 0x4, offset = 0x4, fixed_abs, tag = 'smem constant byte address 0x4 - core index']
  #allocation1 [shape = 'u32[144,128]{1,0:T(1,128)}', space=vmem, size = 0x12000, scoped, tag = 'internal scratch']
  #allocation2 [shape = 'f32[1]{0:T(128)S(6)}', space=smem, size = 0x200, scoped, tag = 'scoped memory for tpu_custom_call.1']
  #allocation3 [shape = 'f32[1]{0:T(128)S(6)}', space=smem, size = 0x200, scoped, tag = 'scoped memory for tpu_custom_call.1']
  %s0 = inlined_call_operand.vmem [shape: f32[7,2,4], index: 0, kind: input, shape index: {}]
  %s1 = inlined_call_operand.vmem [shape: f32[2,4], index: 1, kind: input, shape index: {}]
  %s2 = inlined_call_operand.vmem [shape: f32[12,36], index: 2, kind: input, shape index: {}]
  %s3 = inlined_call_operand.vmem [shape: f32[1,36], index: 3, kind: input, shape index: {}]
  %s4 = inlined_call_operand.vmem [shape: f32[1,36], index: 4, kind: input, shape index: {}]
  %s5 = inlined_call_operand.<no memory space> [shape: f32[1], index: 5, kind: input, shape index: {}]
  %s6 = inlined_call_operand.<no memory space> [shape: f32[1], index: 6, kind: input, shape index: {}]
  %s7 = inlined_call_operand.vmem [shape: f32[7,2], index: 7, kind: output, shape index: {}]
  %s8 = sld [smem:[#allocation0]]
  $region38: #{tpu_custom_call.1} parent=0
    _
  %s10 = ssub.s32 1, %s8
  %s11 = scalar_select 0, %s10, %s8
  %12 = sst [smem:[#allocation2]] %s5
  %13 = sst [smem:[#allocation3]] %s6
  // Predicated region
  $region2: #{tpu_custom_call.1} parent=0 // pred_check
    _
  $region3: #{tpu_custom_call.1} parent=0 // pred_check_branch
    %15 = sbr.rel (0) target = $region5
  $region4: #{tpu_custom_call.1} parent=0 // pred_region
    _
  $region5: #{tpu_custom_call.1} parent=0 // pred_fallthru
    _
  // Predicated region
  $region6: #{tpu_custom_call.1} parent=0 // pred_check
    _
  $region7: #{tpu_custom_call.1} parent=0 // pred_check_branch
    %17 = sbr.rel (0) target = $region9
  $region8: #{tpu_custom_call.1} parent=0 // pred_region
    _
  $region9: #{tpu_custom_call.1} parent=0 // pred_fallthru
    _
  // Predicated region
  $region10: #{tpu_custom_call.1} parent=0 // pred_check
    _
  $region11: #{tpu_custom_call.1} parent=0 // pred_check_branch
    %19 = sbr.rel (0) target = $region13
  $region12: #{tpu_custom_call.1} parent=0 // pred_region
    _
  $region13: #{tpu_custom_call.1} parent=0 // pred_fallthru
    _
  // Predicated region
  $region14: #{tpu_custom_call.1} parent=0 // pred_check
    _
  $region15: #{tpu_custom_call.1} parent=0 // pred_check_branch
    %21 = sbr.rel (0) target = $region17
  $region16: #{tpu_custom_call.1} parent=0 // pred_region
    _
  $region17: #{tpu_custom_call.1} parent=0 // pred_fallthru
    _
  // Predicated region
  $region18: #{tpu_custom_call.1} parent=0 // pred_check
    _
  $region19: #{tpu_custom_call.1} parent=0 // pred_check_branch
    %23 = sbr.rel (0) target = $region21
  $region20: #{tpu_custom_call.1} parent=0 // pred_region
    _
  $region21: #{tpu_custom_call.1} parent=0 // pred_fallthru
    _
  // Predicated region
  $region22: #{tpu_custom_call.1} parent=0 // pred_check
    _
  $region23: #{tpu_custom_call.1} parent=0 // pred_check_branch
    %25 = sbr.rel (0) target = $region25
  $region24: #{tpu_custom_call.1} parent=0 // pred_region
    _
  $region25: #{tpu_custom_call.1} parent=0 // pred_fallthru
    _
  // Predicated region
  $region26: #{tpu_custom_call.1} parent=0 // pred_check
    _
  $region27: #{tpu_custom_call.1} parent=0 // pred_check_branch
    %27 = sbr.rel (0) target = $region29
  $region28: #{tpu_custom_call.1} parent=0 // pred_region
    _
  $region29: #{tpu_custom_call.1} parent=0 // pred_fallthru
    _
  %v28 = vld [vmem:[%s1] sm:$0x3]
  %v29 = vld [vmem:[%s3] sm:$0x1]
  %v30 = vld [vmem:[%s2 + $0x8] sm:$0x1]
  %32 = vset.pattern.permute.xlu0 0
  %33 = vperm.xlu0 %32, %v28
  %v34 = vpop.permute.xlu0 %33
  %v36 = vlaneseq
  %v37 = vshrl.u32 %v36, 7
  %v38 = vsub.s32 0, %v37
  %v39 = vrot.slane %v30, %v38
  %v40 = vmul.f32 %v34, %v39
  %v42 = vlaneseq
  %v43 = vshrl.u32 %v42, 7
  %v44 = vsub.s32 0, %v43
  %v45 = vrot.slane %v29, %v44
  %v47 = vadd.f32 %v45, %v40
  %v48 = vld [vmem:[%s2] sm:$0x1]
  %v49 = vld [vmem:[%s2 + $0x4] sm:$0x1]
  %v50 = vlaneseq
  %v51 = vshrl.u32 %v50, 7
  %v52 = vsub.s32 0, %v51
  %v53 = vrot.slane %v49, %v52
  %v54 = vmul.f32 %v34, %v53
  %v55 = vlaneseq
  %v56 = vshrl.u32 %v55, 7
  %v57 = vsub.s32 0, %v56
  %v58 = vrot.slane %v48, %v57
  %v59 = vadd.f32 %v58, %v54
  %v60 = vld [vmem:[%s2 + $0x9] sm:$0x1]
  %61 = vset.pattern.permute.xlu0 1
  %62 = vperm.xlu0 %61, %v28
  %v63 = vpop.permute.xlu0 %62
  %v65 = vlaneseq
  %v66 = vshrl.u32 %v65, 7
  %v67 = vsub.s32 0, %v66
  %v68 = vrot.slane %v60, %v67
  %v69 = vmul.f32 %v63, %v68
  %v70 = vadd.f32 %v47, %v69
  %v71 = vld [vmem:[%s2 + $0x1] sm:$0x1]
  %v72 = vld [vmem:[%s2 + $0x5] sm:$0x1]
  %v73 = vlaneseq
  %v74 = vshrl.u32 %v73, 7
  %v75 = vsub.s32 0, %v74
  %v76 = vrot.slane %v72, %v75
  %v77 = vmul.f32 %v63, %v76
  %v78 = vlaneseq
  %v79 = vshrl.u32 %v78, 7
  %v80 = vsub.s32 0, %v79
  %v81 = vrot.slane %v71, %v80
  %v82 = vadd.f32 %v81, %v77
  %v83 = vld [vmem:[%s2 + $0xa] sm:$0x1]
  %84 = vset.pattern.permute.xlu0 2
  %85 = vperm.xlu0 %84, %v28
  %v86 = vpop.permute.xlu0 %85
  %v88 = vlaneseq
  %v89 = vshrl.u32 %v88, 7
  %v90 = vsub.s32 0, %v89
  %v91 = vrot.slane %v83, %v90
  %v92 = vmul.f32 %v86, %v91
  %v93 = vadd.f32 %v70, %v92
  %v94 = vld [vmem:[%s2 + $0x2] sm:$0x1]
  %v95 = vld [vmem:[%s2 + $0x6] sm:$0x1]
  %v96 = vlaneseq
  %v97 = vshrl.u32 %v96, 7
  %v98 = vsub.s32 0, %v97
  %v99 = vrot.slane %v95, %v98
  %v100 = vmul.f32 %v86, %v99
  %v101 = vlaneseq
  %v102 = vshrl.u32 %v101, 7
  %v103 = vsub.s32 0, %v102
  %v104 = vrot.slane %v94, %v103
  %v105 = vadd.f32 %v104, %v100
  %v106 = vld [vmem:[%s2 + $0xb] sm:$0x1]
  %107 = vset.pattern.permute.xlu0 3
  %108 = vperm.xlu0 %107, %v28
  %v109 = vpop.permute.xlu0 %108
  %v111 = vlaneseq
  %v112 = vshrl.u32 %v111, 7
  %v113 = vsub.s32 0, %v112
  %v114 = vrot.slane %v106, %v113
  %v115 = vmul.f32 %v109, %v114
  %v116 = vadd.f32 %v93, %v115
  %v117 = vld [vmem:[%s2 + $0x3] sm:$0x1]
  %v118 = vld [vmem:[%s2 + $0x7] sm:$0x1]
  %v119 = vlaneseq
  %v120 = vshrl.u32 %v119, 7
  %v121 = vsub.s32 0, %v120
  %v122 = vrot.slane %v118, %v121
  %v123 = vmul.f32 %v109, %v122
  %v124 = vlaneseq
  %v125 = vshrl.u32 %v124, 7
  %v126 = vsub.s32 0, %v125
  %v127 = vrot.slane %v117, %v126
  %v128 = vadd.f32 %v127, %v123
  %v129 = vld [vmem:[%s0] sm:$0x3]
  %v130 = vld [vmem:[%s0 + $0x2] sm:$0x3]
  %v131 = vld [vmem:[%s0 + $0x4] sm:$0x3]
  %v132 = vld [vmem:[%s0 + $0x6] sm:$0x3]
  %v133 = vld [vmem:[%s0 + $0x8] sm:$0x3]
  %v134 = vld [vmem:[%s0 + $0xa] sm:$0x3]
  %v135 = vld [vmem:[%s0 + $0xc] sm:$0x3]
  %137 = vset.pattern.permute.xlu0 0
  %138 = vperm.xlu0 %137, %v129
  %v139 = vpop.permute.xlu0 %138
  %142 = vset.pattern.permute.xlu0 0
  %143 = vperm.xlu0 %142, %v130
  %v144 = vpop.permute.xlu0 %143
  %147 = vset.pattern.permute.xlu0 0
  %148 = vperm.xlu0 %147, %v131
  %v149 = vpop.permute.xlu0 %148
  %152 = vset.pattern.permute.xlu0 0
  %153 = vperm.xlu0 %152, %v132
  %v154 = vpop.permute.xlu0 %153
  %157 = vset.pattern.permute.xlu0 0
  %158 = vperm.xlu0 %157, %v133
  %v159 = vpop.permute.xlu0 %158
  %162 = vset.pattern.permute.xlu0 0
  %163 = vperm.xlu0 %162, %v134
  %v164 = vpop.permute.xlu0 %163
  %167 = vset.pattern.permute.xlu0 0
  %168 = vperm.xlu0 %167, %v135
  %v169 = vpop.permute.xlu0 %168
  %v171 = vmul.f32 %v139, %v59
  %v172 = vmul.f32 %v144, %v59
  %v173 = vmul.f32 %v149, %v59
  %v174 = vmul.f32 %v154, %v59
  %v175 = vmul.f32 %v159, %v59
  %v176 = vmul.f32 %v164, %v59
  %v177 = vmul.f32 %v169, %v59
  %v178 = vadd.f32 %v116, %v171
  %v179 = vadd.f32 %v116, %v172
  %v180 = vadd.f32 %v116, %v173
  %v181 = vadd.f32 %v116, %v174
  %v182 = vadd.f32 %v116, %v175
  %v183 = vadd.f32 %v116, %v176
  %v184 = vadd.f32 %v116, %v177
  %185 = vset.pattern.permute.xlu0 1
  %186 = vperm.xlu0 %185, %v129
  %v187 = vpop.permute.xlu0 %186
  %189 = vset.pattern.permute.xlu0 1
  %190 = vperm.xlu0 %189, %v130
  %v191 = vpop.permute.xlu0 %190
  %193 = vset.pattern.permute.xlu0 1
  %194 = vperm.xlu0 %193, %v131
  %v195 = vpop.permute.xlu0 %194
  %197 = vset.pattern.permute.xlu0 1
  %198 = vperm.xlu0 %197, %v132
  %v199 = vpop.permute.xlu0 %198
  %201 = vset.pattern.permute.xlu0 1
  %202 = vperm.xlu0 %201, %v133
  %v203 = vpop.permute.xlu0 %202
  %205 = vset.pattern.permute.xlu0 1
  %206 = vperm.xlu0 %205, %v134
  %v207 = vpop.permute.xlu0 %206
  %209 = vset.pattern.permute.xlu0 1
  %210 = vperm.xlu0 %209, %v135
  %v211 = vpop.permute.xlu0 %210
  %v213 = vmul.f32 %v187, %v82
  %v214 = vmul.f32 %v191, %v82
  %v215 = vmul.f32 %v195, %v82
  %v216 = vmul.f32 %v199, %v82
  %v217 = vmul.f32 %v203, %v82
  %v218 = vmul.f32 %v207, %v82
  %v219 = vmul.f32 %v211, %v82
  %v220 = vadd.f32 %v178, %v213
  %v221 = vadd.f32 %v179, %v214
  %v222 = vadd.f32 %v180, %v215
  %v223 = vadd.f32 %v181, %v216
  %v224 = vadd.f32 %v182, %v217
  %v225 = vadd.f32 %v183, %v218
  %v226 = vadd.f32 %v184, %v219
  %227 = vset.pattern.permute.xlu0 2
  %228 = vperm.xlu0 %227, %v129
  %v229 = vpop.permute.xlu0 %228
  %231 = vset.pattern.permute.xlu0 2
  %232 = vperm.xlu0 %231, %v130
  %v233 = vpop.permute.xlu0 %232
  %235 = vset.pattern.permute.xlu0 2
  %236 = vperm.xlu0 %235, %v131
  %v237 = vpop.permute.xlu0 %236
  %239 = vset.pattern.permute.xlu0 2
  %240 = vperm.xlu0 %239, %v132
  %v241 = vpop.permute.xlu0 %240
  %243 = vset.pattern.permute.xlu0 2
  %244 = vperm.xlu0 %243, %v133
  %v245 = vpop.permute.xlu0 %244
  %247 = vset.pattern.permute.xlu0 2
  %248 = vperm.xlu0 %247, %v134
  %v249 = vpop.permute.xlu0 %248
  %251 = vset.pattern.permute.xlu0 2
  %252 = vperm.xlu0 %251, %v135
  %v253 = vpop.permute.xlu0 %252
  %v255 = vmul.f32 %v229, %v105
  %v256 = vmul.f32 %v233, %v105
  %v257 = vmul.f32 %v237, %v105
  %v258 = vmul.f32 %v241, %v105
  %v259 = vmul.f32 %v245, %v105
  %v260 = vmul.f32 %v249, %v105
  %v261 = vmul.f32 %v253, %v105
  %v262 = vadd.f32 %v220, %v255
  %v263 = vadd.f32 %v221, %v256
  %v264 = vadd.f32 %v222, %v257
  %v265 = vadd.f32 %v223, %v258
  %v266 = vadd.f32 %v224, %v259
  %v267 = vadd.f32 %v225, %v260
  %v268 = vadd.f32 %v226, %v261
  %269 = vset.pattern.permute.xlu0 3
  %270 = vperm.xlu0 %269, %v129
  %v271 = vpop.permute.xlu0 %270
  %273 = vset.pattern.permute.xlu0 3
  %274 = vperm.xlu0 %273, %v130
  %v275 = vpop.permute.xlu0 %274
  %277 = vset.pattern.permute.xlu0 3
  %278 = vperm.xlu0 %277, %v131
  %v279 = vpop.permute.xlu0 %278
  %281 = vset.pattern.permute.xlu0 3
  %282 = vperm.xlu0 %281, %v132
  %v283 = vpop.permute.xlu0 %282
  %285 = vset.pattern.permute.xlu0 3
  %286 = vperm.xlu0 %285, %v133
  %v287 = vpop.permute.xlu0 %286
  %289 = vset.pattern.permute.xlu0 3
  %290 = vperm.xlu0 %289, %v134
  %v291 = vpop.permute.xlu0 %290
  %293 = vset.pattern.permute.xlu0 3
  %294 = vperm.xlu0 %293, %v135
  %v295 = vpop.permute.xlu0 %294
  %v297 = vmul.f32 %v271, %v128
  %v298 = vmul.f32 %v275, %v128
  %v299 = vmul.f32 %v279, %v128
  %v300 = vmul.f32 %v283, %v128
  %v301 = vmul.f32 %v287, %v128
  %v302 = vmul.f32 %v291, %v128
  %v303 = vmul.f32 %v295, %v128
  %v304 = vadd.f32 %v262, %v297
  %v305 = vadd.f32 %v263, %v298
  %v306 = vadd.f32 %v264, %v299
  %v307 = vadd.f32 %v265, %v300
  %v308 = vadd.f32 %v266, %v301
  %v309 = vadd.f32 %v267, %v302
  %v310 = vadd.f32 %v268, %v303
  %vm311 = vcmask 287744
  %v312 = vsel %vm311, %v304, 0.0
  %v313 = vrot.slane %v312, 4
  %v314 = vadd.f32 %v312, %v313
  %v315 = vrot.slane %v314, 2
  %v316 = vadd.f32 %v314, %v315
  %v317 = vrot.slane %v316, 1
  %v318 = vadd.f32 %v316, %v317
  %v319 = vsel %vm311, %v305, 0.0
  %v320 = vrot.slane %v319, 4
  %v321 = vadd.f32 %v319, %v320
  %v322 = vrot.slane %v321, 2
  %v323 = vadd.f32 %v321, %v322
  %v324 = vrot.slane %v323, 1
  %v325 = vadd.f32 %v323, %v324
  %v326 = vsel %vm311, %v306, 0.0
  %v327 = vrot.slane %v326, 4
  %v328 = vadd.f32 %v326, %v327
  %v329 = vrot.slane %v328, 2
  %v330 = vadd.f32 %v328, %v329
  %v331 = vrot.slane %v330, 1
  %v332 = vadd.f32 %v330, %v331
  %v333 = vsel %vm311, %v307, 0.0
  %v334 = vrot.slane %v333, 4
  %v335 = vadd.f32 %v333, %v334
  %v336 = vrot.slane %v335, 2
  %v337 = vadd.f32 %v335, %v336
  %v338 = vrot.slane %v337, 1
  %v339 = vadd.f32 %v337, %v338
  %v340 = vsel %vm311, %v308, 0.0
  %v341 = vrot.slane %v340, 4
  %v342 = vadd.f32 %v340, %v341
  %v343 = vrot.slane %v342, 2
  %v344 = vadd.f32 %v342, %v343
  %v345 = vrot.slane %v344, 1
  %v346 = vadd.f32 %v344, %v345
  %v347 = vsel %vm311, %v309, 0.0
  %v348 = vrot.slane %v347, 4
  %v349 = vadd.f32 %v347, %v348
  %v350 = vrot.slane %v349, 2
  %v351 = vadd.f32 %v349, %v350
  %v352 = vrot.slane %v351, 1
  %v353 = vadd.f32 %v351, %v352
  %v354 = vsel %vm311, %v310, 0.0
  %v355 = vrot.slane %v354, 4
  %v356 = vadd.f32 %v354, %v355
  %v357 = vrot.slane %v356, 2
  %v358 = vadd.f32 %v356, %v357
  %v359 = vrot.slane %v358, 1
  %v360 = vadd.f32 %v358, %v359
  %v361 = vrcp.pop 2.0
  %v362 = vmul.f32 %v318, %v361
  %v363 = vmul.f32 %v325, %v361
  %v364 = vmul.f32 %v332, %v361
  %v365 = vmul.f32 %v339, %v361
  %v366 = vmul.f32 %v346, %v361
  %v367 = vmul.f32 %v353, %v361
  %v368 = vmul.f32 %v360, %v361
  %v369 = vsub.f32 %v304, %v362
  %v370 = vsub.f32 %v305, %v363
  %v371 = vsub.f32 %v306, %v364
  %v372 = vsub.f32 %v307, %v365
  %v373 = vsub.f32 %v308, %v366
  %v374 = vsub.f32 %v309, %v367
  %v375 = vsub.f32 %v310, %v368
  %v376 = vmul.f32 %v369, %v369
  %v377 = vmul.f32 %v370, %v370
  %v378 = vmul.f32 %v371, %v371
  %v379 = vmul.f32 %v372, %v372
  %v380 = vmul.f32 %v373, %v373
  %v381 = vmul.f32 %v374, %v374
  %v382 = vmul.f32 %v375, %v375
  %v383 = vsel %vm311, %v376, 0.0
  %v384 = vrot.slane %v383, 4
  %v385 = vadd.f32 %v383, %v384
  %v386 = vrot.slane %v385, 2
  %v387 = vadd.f32 %v385, %v386
  %v388 = vrot.slane %v387, 1
  %v389 = vadd.f32 %v387, %v388
  %v390 = vsel %vm311, %v377, 0.0
  %v391 = vrot.slane %v390, 4
  %v392 = vadd.f32 %v390, %v391
  %v393 = vrot.slane %v392, 2
  %v394 = vadd.f32 %v392, %v393
  %v395 = vrot.slane %v394, 1
  %v396 = vadd.f32 %v394, %v395
  %v397 = vsel %vm311, %v378, 0.0
  %v398 = vrot.slane %v397, 4
  %v399 = vadd.f32 %v397, %v398
  %v400 = vrot.slane %v399, 2
  %v401 = vadd.f32 %v399, %v400
  %v402 = vrot.slane %v401, 1
  %v403 = vadd.f32 %v401, %v402
  %v404 = vsel %vm311, %v379, 0.0
  %v405 = vrot.slane %v404, 4
  %v406 = vadd.f32 %v404, %v405
  %v407 = vrot.slane %v406, 2
  %v408 = vadd.f32 %v406, %v407
  %v409 = vrot.slane %v408, 1
  %v410 = vadd.f32 %v408, %v409
  %v411 = vsel %vm311, %v380, 0.0
  %v412 = vrot.slane %v411, 4
  %v413 = vadd.f32 %v411, %v412
  %v414 = vrot.slane %v413, 2
  %v415 = vadd.f32 %v413, %v414
  %v416 = vrot.slane %v415, 1
  %v417 = vadd.f32 %v415, %v416
  %v418 = vsel %vm311, %v381, 0.0
  %v419 = vrot.slane %v418, 4
  %v420 = vadd.f32 %v418, %v419
  %v421 = vrot.slane %v420, 2
  %v422 = vadd.f32 %v420, %v421
  %v423 = vrot.slane %v422, 1
  %v424 = vadd.f32 %v422, %v423
  %v425 = vsel %vm311, %v382, 0.0
  %v426 = vrot.slane %v425, 4
  %v427 = vadd.f32 %v425, %v426
  %v428 = vrot.slane %v427, 2
  %v429 = vadd.f32 %v427, %v428
  %v430 = vrot.slane %v429, 1
  %v431 = vadd.f32 %v429, %v430
  %v432 = vrsqrt.pop %v389
  %v433 = vrsqrt.pop %v396
  %v434 = vrsqrt.pop %v403
  %v435 = vrsqrt.pop %v410
  %v436 = vrsqrt.pop %v417
  %v437 = vrsqrt.pop %v424
  %v438 = vrsqrt.pop %v431
  %v439 = vmul.f32 %v369, %v432
  %v440 = vmul.f32 %v370, %v433
  %v441 = vmul.f32 %v371, %v434
  %v442 = vmul.f32 %v372, %v435
  %v443 = vmul.f32 %v373, %v436
  %v444 = vmul.f32 %v374, %v437
  %v445 = vmul.f32 %v375, %v438
  %v446 = vsub.f32 0.0, %v439
  %v447 = vsub.f32 0.0, %v440
  %v448 = vsub.f32 0.0, %v441
  %v449 = vsub.f32 0.0, %v442
  %v450 = vsub.f32 0.0, %v443
  %v451 = vsub.f32 0.0, %v444
  %v452 = vsub.f32 0.0, %v445
  %v453 = vmul.f32 %v446, 1.442695
  %v454 = vpow.pop %v453
  %v455 = vmul.f32 %v447, 1.442695
  %v456 = vpow.pop %v455
  %v457 = vmul.f32 %v448, 1.442695
  %v458 = vpow.pop %v457
  %v459 = vmul.f32 %v449, 1.442695
  %v460 = vpow.pop %v459
  %v461 = vmul.f32 %v450, 1.442695
  %v462 = vpow.pop %v461
  %v463 = vmul.f32 %v451, 1.442695
  %v464 = vpow.pop %v463
  %v465 = vmul.f32 %v452, 1.442695
  %v466 = vpow.pop %v465
  %v467 = vadd.f32 %v454, 1.0
  %v468 = vadd.f32 %v456, 1.0
  %v469 = vadd.f32 %v458, 1.0
  %v470 = vadd.f32 %v460, 1.0
  %v471 = vadd.f32 %v462, 1.0
  %v472 = vadd.f32 %v464, 1.0
  %v473 = vadd.f32 %v466, 1.0
  %v474 = vrcp.pop %v467
  %v475 = vmul.f32 1.0, %v474
  %v476 = vrcp.pop %v468
  %v477 = vmul.f32 1.0, %v476
  %v478 = vrcp.pop %v469
  %v479 = vmul.f32 1.0, %v478
  %v480 = vrcp.pop %v470
  %v481 = vmul.f32 1.0, %v480
  %v482 = vrcp.pop %v471
  %v483 = vmul.f32 1.0, %v482
  %v484 = vrcp.pop %v472
  %v485 = vmul.f32 1.0, %v484
  %v486 = vrcp.pop %v473
  %v487 = vmul.f32 1.0, %v486
  %s488 = sld [smem:[#allocation3]]
  %s489 = ssub.f32 1.0, %s488
  %v490 = vstv %s489
  %v491 = vmul.f32 %v490, %v475
  %v492 = vmul.f32 %v490, %v477
  %v493 = vmul.f32 %v490, %v479
  %v494 = vmul.f32 %v490, %v481
  %v495 = vmul.f32 %v490, %v483
  %v496 = vmul.f32 %v490, %v485
  %v497 = vmul.f32 %v490, %v487
  %v498 = vstv %s488
  %v499 = vadd.f32 %v498, %v491
  %v500 = vadd.f32 %v498, %v492
  %v501 = vadd.f32 %v498, %v493
  %v502 = vadd.f32 %v498, %v494
  %v503 = vadd.f32 %v498, %v495
  %v504 = vadd.f32 %v498, %v496
  %v505 = vadd.f32 %v498, %v497
  %v506 = vmul.f32 %v304, %v499
  %v507 = vmul.f32 %v305, %v500
  %v508 = vmul.f32 %v306, %v501
  %v509 = vmul.f32 %v307, %v502
  %v510 = vmul.f32 %v308, %v503
  %v511 = vmul.f32 %v309, %v504
  %v512 = vmul.f32 %v310, %v505
  %v513 = vld [vmem:[%s4] sm:$0x1]
  %v515 = vlaneseq
  %v516 = vshrl.u32 %v515, 7
  %v517 = vsub.s32 0, %v516
  %v518 = vrot.slane %v513, %v517
  %v520 = vmul.f32 %v506, %v518
  %v521 = vmul.f32 %v507, %v518
  %v522 = vmul.f32 %v508, %v518
  %v523 = vmul.f32 %v509, %v518
  %v524 = vmul.f32 %v510, %v518
  %v525 = vmul.f32 %v511, %v518
  %v526 = vmul.f32 %v512, %v518
  %v527 = vsel %vm311, %v520, 0.0
  %528 = vadd.xlane.f32.xlu0 %v527
  %v529 = vpop.xlane.xlu0 %528
  %v530 = vsel %vm311, %v521, 0.0
  %531 = vadd.xlane.f32.xlu0 %v530
  %v532 = vpop.xlane.xlu0 %531
  %v533 = vsel %vm311, %v522, 0.0
  %534 = vadd.xlane.f32.xlu0 %v533
  %v535 = vpop.xlane.xlu0 %534
  %v536 = vsel %vm311, %v523, 0.0
  %537 = vadd.xlane.f32.xlu0 %v536
  %v538 = vpop.xlane.xlu0 %537
  %v539 = vsel %vm311, %v524, 0.0
  %540 = vadd.xlane.f32.xlu0 %v539
  %v541 = vpop.xlane.xlu0 %540
  %v542 = vsel %vm311, %v525, 0.0
  %543 = vadd.xlane.f32.xlu0 %v542
  %v544 = vpop.xlane.xlu0 %543
  %v545 = vsel %vm311, %v526, 0.0
  %546 = vadd.xlane.f32.xlu0 %v545
  %v547 = vpop.xlane.xlu0 %546
  %s548 = sld [smem:[#allocation2]]
  %v549 = vstv %s548
  %v550 = vadd.f32 %v529, %v549
  %v551 = vadd.f32 %v532, %v549
  %v552 = vadd.f32 %v535, %v549
  %v553 = vadd.f32 %v538, %v549
  %v554 = vadd.f32 %v541, %v549
  %v555 = vadd.f32 %v544, %v549
  %v556 = vadd.f32 %v547, %v549
  %v564 = vlaneseq
  %v565 = vand.u32 %v564, 127
  %v566 = vlaneseq
  %v567 = vshrl.u32 %v566, 7
  %v568 = vsub.s32 %v565, %v567
  %v569 = vrot.slane %v550, %v568
  %v570 = vlaneseq
  %v571 = vshrl.u32 %v570, 7
  %v572 = vsub.s32 %v565, %v571
  %v573 = vrot.slane %v551, %v572
  %v574 = vlaneseq
  %v575 = vshrl.u32 %v574, 7
  %v576 = vsub.s32 %v565, %v575
  %v577 = vrot.slane %v552, %v576
  %v578 = vlaneseq
  %v579 = vshrl.u32 %v578, 7
  %v580 = vsub.s32 %v565, %v579
  %v581 = vrot.slane %v553, %v580
  %v582 = vlaneseq
  %v583 = vshrl.u32 %v582, 7
  %v584 = vsub.s32 %v565, %v583
  %v585 = vrot.slane %v554, %v584
  %v586 = vlaneseq
  %v587 = vshrl.u32 %v586, 7
  %v588 = vsub.s32 %v565, %v587
  %v589 = vrot.slane %v555, %v588
  %v590 = vlaneseq
  %v591 = vshrl.u32 %v590, 7
  %v592 = vsub.s32 %v565, %v591
  %v593 = vrot.slane %v556, %v592
  %vm594 = vcmask 1041409
  %v595 = vsel %vm594, %v573, %v569
  %vm596 = vcmask 1042434
  %v597 = vsel %vm596, %v577, %v595
  %vm598 = vcmask 1043459
  %v599 = vsel %vm598, %v581, %v597
  %vm600 = vcmask 1044484
  %v601 = vsel %vm600, %v585, %v599
  %vm602 = vcmask 1045509
  %v603 = vsel %vm602, %v589, %v601
  %vm604 = vcmask 1046534
  %v605 = vsel %vm604, %v593, %v603
  %vm607 = vcmask 14336
  %608 = vst.msk [vmem:[%s7] sm:$0x7f] %vm607, %v605
  // Predicated region
  $region30: #{tpu_custom_call.1} parent=0 // pred_check
    _
  $region31: #{tpu_custom_call.1} parent=0 // pred_check_branch
    %610 = sbr.rel (0) target = $region33
  $region32: #{tpu_custom_call.1} parent=0 // pred_region
    _
  $region33: #{tpu_custom_call.1} parent=0 // pred_fallthru
    _
  // Predicated region
  $region34: #{tpu_custom_call.1} parent=0 // pred_check
    _
  $region35: #{tpu_custom_call.1} parent=0 // pred_check_branch
    %612 = sbr.rel (0) target = $region37
  $region36: #{tpu_custom_call.1} parent=0 // pred_region
    _
  $region37: #{tpu_custom_call.1} parent=0 // pred_fallthru
    _

</llo_original>
